<compile_context>
chip_gen: v6e
topology: v6e:2x2x1
jax: 0.10.0
libtpu: 0.0.40
codegen_flags: <defaults>
</compile_context>

<pallas_src>
import functools

import jax
import jax.numpy as jnp
from jax.experimental import pallas as pl
from jax.experimental.pallas import tpu as pltpu

_LANE = 128


def _round_up(a, b):
    return ((a + b - 1) // b) * b


def _vmem_capacity_bytes():
    """Per-core VMEM capacity; conservative 64 MiB fallback (v7x per-TensorCore)."""
    try:
        return int(pltpu.get_tpu_info().vmem_capacity_bytes)
    except Exception:
        return 64 << 20


def mlp_softmax_kernel(x_ref, w1_ref, b1_ref, w2_ref, b2_ref, o_ref):
    # x_ref: (tm, in_size) f32 — cast to bf16 in-kernel (no separate XLA pass over x).
    x_bf = x_ref[...].astype(jnp.bfloat16)

    # Layer 1: bf16 MXU matmul, f32 accumulation; bias + ReLU on the VPU in f32.
    h = jnp.dot(x_bf, w1_ref[...], preferred_element_type=jnp.float32)
    h = jnp.maximum(h + b1_ref[...], 0.0)

    # Layer 2: bf16 MXU matmul, f32 accumulation.
    logits = jnp.dot(h.astype(jnp.bfloat16), w2_ref[...],
                     preferred_element_type=jnp.float32) + b2_ref[...]

    # Numerically stable softmax over the (padded) class axis, in f32.
    # Padded classes carry a -1e30 bias -> exp underflows to exactly 0, so the
    # normalization over the real classes matches PyTorch's Softmax(dim=1).
    m = jnp.max(logits, axis=-1, keepdims=True)
    e = jnp.exp(logits - m)
    denom = jnp.sum(e, axis=-1, keepdims=True)
    o_ref[...] = (e * pl.reciprocal(denom, approx=True)).astype(o_ref.dtype)


def prepare_params(w1, b1, w2, b2):
    """One-time parameter prep (call OUTSIDE the per-step forward):
       pad hidden to a multiple of 128 (zeros, exact), pad classes to a multiple of 128
       (-1e30 bias => probability exactly 0), and cast MXU operands to bf16 once."""
    in_size, hidden = w1.shape
    num_classes = w2.shape[1]
    hidden_p = _round_up(hidden, _LANE)
    classes_p = _round_up(num_classes, _LANE)

    w1 = jnp.pad(w1, ((0, 0), (0, hidden_p - hidden)))
    b1 = jnp.pad(jnp.reshape(b1, (1, -1)), ((0, 0), (0, hidden_p - hidden)))
    w2 = jnp.pad(w2, ((0, hidden_p - hidden), (0, classes_p - num_classes)))
    b2 = jnp.pad(jnp.reshape(b2, (1, -1)), ((0, 0), (0, classes_p - num_classes)),
                 constant_values=-1e30)

    return (w1.astype(jnp.bfloat16), b1.astype(jnp.float32),
            w2.astype(jnp.bfloat16), b2.astype(jnp.float32), int(num_classes))


def _derive_tiling(batch, in_size, hidden_p, classes_p, tile_m):
    """Pick the batch tile and VMEM budget from shapes + device VMEM capacity."""
    batch_8 = _round_up(batch, 8)
    vmem_cap = _vmem_capacity_bytes()

    # Resident weights (double-buffered bf16 by default) + padded f32 biases.
    weight_bytes = 2 * (in_size * hidden_p + hidden_p * classes_p) * 2
    bias_bytes = 2 * 8 * (hidden_p + classes_p) * 4
    # Per-row VMEM: double-buffered f32 x tile, double-buffered f32 out tile,
    # f32 h temporary, f32 logits/exp temporaries.
    per_row = 2 * in_size * 4 + 2 * classes_p * 4 + hidden_p * 4 + 2 * classes_p * 4

    if tile_m is None:
        head = int(vmem_cap * 0.7) - weight_bytes - bias_bytes - (4 << 20)
        tile_m = max(16, head // max(per_row, 1))
        tile_m = min(tile_m, 1024)
        if tile_m >= 256:
            tile_m = (tile_m // 256) * 256      # feed the 256-wide MXU cleanly
        else:
            tile_m = max(16, (tile_m // 16) * 16)  # bf16 sublane packing

    tm = max(8, min(int(tile_m), batch_8))
    if tm >= 16:
        tm = (tm // 16) * 16                    # bf16 sublane-friendly

    # Keep >= 2 grid steps on large batches so both v7x TensorCores get work.
    if pl.cdiv(batch, tm) < 2 and batch_8 >= 32:
        tm = min(tm, _round_up(pl.cdiv(batch_8, 2), 16))
    tm = max(8, tm)

    vmem_need = weight_bytes + bias_bytes + tm * per_row + (4 << 20)
    vmem_limit = int(min(int(vmem_cap * 0.9), max(vmem_need, 32 << 20)))
    return tm, vmem_limit


@functools.partial(jax.jit, static_argnames=("num_classes", "tile_m"))
def _mlp_softmax_padded(x, w1, b1, w2, b2, *, num_classes, tile_m=None):
    batch, in_size = x.shape
    hidden_p = w1.shape[1]
    classes_p = w2.shape[1]

    tm, vmem_limit = _derive_tiling(batch, in_size, hidden_p, classes_p, tile_m)
    grid = (pl.cdiv(batch, tm),)

    cost = pl.CostEstimate(
        flops=int(2 * batch * (in_size * hidden_p + hidden_p * classes_p)),
        transcendentals=int(batch * classes_p),
        bytes_accessed=int(
            batch * in_size * 4                                   # x (f32, read once)
            + (in_size * hidden_p + hidden_p * classes_p) * 2     # bf16 weights
            + (hidden_p + classes_p) * 4                          # f32 biases
            + batch * classes_p * 4                               # f32 output
        ),
    )

    out = pl.pallas_call(
        mlp_softmax_kernel,
        out_shape=jax.ShapeDtypeStruct((batch, classes_p), jnp.float32),
        grid_spec=pltpu.PrefetchScalarGridSpec(
            num_scalar_prefetch=0,
            grid=grid,
            in_specs=[
                pl.BlockSpec((tm, in_size), lambda i: (i, 0)),           # x tile (f32, cast in-kernel)
                pl.BlockSpec((in_size, hidden_p), lambda i: (0, 0)),     # w1 (bf16, VMEM-resident)
                pl.BlockSpec((1, hidden_p), lambda i: (0, 0)),           # b1 (f32)
                pl.BlockSpec((hidden_p, classes_p), lambda i: (0, 0)),   # w2 (bf16, VMEM-resident)
                pl.BlockSpec((1, classes_p), lambda i: (0, 0)),          # b2 (f32, -1e30 on pad)
            ],
            out_specs=pl.BlockSpec((tm, classes_p), lambda i: (i, 0)),
        ),
        compiler_params=pltpu.CompilerParams(
            dimension_semantics=("parallel",),
            vmem_limit_bytes=vmem_limit,
        ),
        cost_estimate=cost,
    )(x, w1, b1, w2, b2)

    if classes_p != num_classes:
        out = out[:, :num_classes]
    return out


def mlp_softmax(x, params, *, tile_m=None):
    """Forward pass. `params` must come from prepare_params() (padded, bf16 weights)."""
    w1, b1, w2, b2, num_classes = params
    return _mlp_softmax_padded(x, w1, b1, w2, b2, num_classes=num_classes, tile_m=tile_m)


def init_params(key, in_size, hidden_size, num_classes):
    """Deterministic PyTorch-style (Kaiming-uniform-ish) init; weights stored transposed."""
    k1, k2, k3, k4 = jax.random.split(key, 4)
    bound1 = 1.0 / (in_size ** 0.5)
    bound2 = 1.0 / (hidden_size ** 0.5)
    w1 = jax.random.uniform(k1, (in_size, hidden_size), jnp.float32, -bound1, bound1)
    b1 = jax.random.uniform(k2, (hidden_size,), jnp.float32, -bound1, bound1)
    w2 = jax.random.uniform(k3, (hidden_size, num_classes), jnp.float32, -bound2, bound2)
    b2 = jax.random.uniform(k4, (num_classes,), jnp.float32, -bound2, bound2)
    return w1, b1, w2, b2


if __name__ == "__main__":
    in_size, hidden_size, num_classes = 32, 64, 16
    batch = 8

    key = jax.random.PRNGKey(0)
    kx, kp = jax.random.split(key)
    x = jax.random.normal(kx, (batch, in_size), jnp.float32)
    w1, b1, w2, b2 = init_params(kp, in_size, hidden_size, num_classes)

    # One-time parameter prep (padding + bf16 cast) outside the per-call forward path.
    params = prepare_params(w1, b1, w2, b2)

    out = mlp_softmax(x, params)
    out = jax.block_until_ready(out)

    # Pure-JAX f32 reference (loosened tolerance: bf16 MXU operands + approx reciprocal).
    h_ref = jnp.maximum(x @ w1 + b1, 0.0)
    logits_ref = h_ref @ w2 + b2
    ref = jax.nn.softmax(logits_ref, axis=1)
    assert out.shape == (batch, num_classes)
    assert jnp.allclose(out, ref, atol=3e-2, rtol=3e-2)
    assert jnp.allclose(jnp.sum(out, axis=1), 1.0, atol=2e-2)

    print("KERNEL_OK")
</pallas_src>

<mosaic_0001>
module attributes {stable_mosaic.version = 11 : i64} {
  func.func @mlp_softmax_kernel(%arg0: i32, %arg1: memref<8x32xf32, #tpu.memory_space<vmem>>, %arg2: memref<32x128xbf16, #tpu.memory_space<vmem>>, %arg3: memref<1x128xf32, #tpu.memory_space<vmem>>, %arg4: memref<128x128xbf16, #tpu.memory_space<vmem>>, %arg5: memref<1x128xf32, #tpu.memory_space<vmem>>, %arg6: memref<8x128xf32, #tpu.memory_space<vmem>>) attributes {dimension_semantics = [#tpu.dimension_semantics<parallel>], iteration_bounds = array<i64: 1>, scalar_prefetch = 0 : i64, scratch_operands = 0 : i64, tpu.core_type = #tpu.core_type<tc>, window_params = [{transform_indices = @transform_0, window_bounds = array<i64: 8, 32>}, {pipeline_mode = #tpu.pipeline_mode<synchronous>, transform_indices = @transform_1, window_bounds = array<i64: 32, 128>}, {pipeline_mode = #tpu.pipeline_mode<synchronous>, transform_indices = @transform_2, window_bounds = array<i64: 1, 128>}, {pipeline_mode = #tpu.pipeline_mode<synchronous>, transform_indices = @transform_3, window_bounds = array<i64: 128, 128>}, {pipeline_mode = #tpu.pipeline_mode<synchronous>, transform_indices = @transform_4, window_bounds = array<i64: 1, 128>}, {transform_indices = @transform_5, window_bounds = array<i64: 8, 128>}]} {
    %c0 = arith.constant 0 : index
    %c0_0 = arith.constant 0 : index
    %0 = vector.load %arg1[%c0, %c0_0] : memref<8x32xf32, #tpu.memory_space<vmem>>, vector<8x32xf32>
    %1 = arith.truncf %0 : vector<8x32xf32> to vector<8x32xbf16>
    %c0_1 = arith.constant 0 : index
    %c0_2 = arith.constant 0 : index
    %2 = vector.load %arg2[%c0_1, %c0_2] : memref<32x128xbf16, #tpu.memory_space<vmem>>, vector<32x128xbf16>
    %cst = arith.constant dense<0.000000e+00> : vector<8x128xf32>
    %3 = tpu.matmul %1, %2, %cst {dimension_numbers = #tpu.dot_dimension_numbers<[1], [0], [0], [1], [0, 0, 1, 1], [], []>} : vector<8x32xbf16>, vector<32x128xbf16>, vector<8x128xf32> -> vector<8x128xf32>
    %c0_3 = arith.constant 0 : index
    %c0_4 = arith.constant 0 : index
    %4 = vector.load %arg3[%c0_3, %c0_4] : memref<1x128xf32, #tpu.memory_space<vmem>>, vector<1x128xf32>
    %5 = vector.broadcast %4 : vector<1x128xf32> to vector<8x128xf32>
    %6 = arith.addf %3, %5 : vector<8x128xf32>
    %cst_5 = arith.constant 0.000000e+00 : f32
    %7 = vector.broadcast %cst_5 : f32 to vector<8x128xf32>
    %8 = arith.maximumf %6, %7 : vector<8x128xf32>
    %9 = arith.truncf %8 : vector<8x128xf32> to vector<8x128xbf16>
    %c0_6 = arith.constant 0 : index
    %c0_7 = arith.constant 0 : index
    %10 = vector.load %arg4[%c0_6, %c0_7] : memref<128x128xbf16, #tpu.memory_space<vmem>>, vector<128x128xbf16>
    %cst_8 = arith.constant dense<0.000000e+00> : vector<8x128xf32>
    %11 = tpu.matmul %9, %10, %cst_8 {dimension_numbers = #tpu.dot_dimension_numbers<[1], [0], [0], [1], [0, 0, 1, 1], [], []>} : vector<8x128xbf16>, vector<128x128xbf16>, vector<8x128xf32> -> vector<8x128xf32>
    %c0_9 = arith.constant 0 : index
    %c0_10 = arith.constant 0 : index
    %12 = vector.load %arg5[%c0_9, %c0_10] : memref<1x128xf32, #tpu.memory_space<vmem>>, vector<1x128xf32>
    %13 = vector.broadcast %12 : vector<1x128xf32> to vector<8x128xf32>
    %14 = arith.addf %11, %13 : vector<8x128xf32>
    %cst_11 = arith.constant dense<0xFF800000> : vector<8xf32>
    %15 = vector.multi_reduction <maximumf>, %14, %cst_11 [1] : vector<8x128xf32> to vector<8xf32>
    %16 = vector.shape_cast %15 : vector<8xf32> to vector<8x1xf32>
    %17 = vector.broadcast %16 : vector<8x1xf32> to vector<8x128xf32>
    %18 = arith.subf %14, %17 : vector<8x128xf32>
    %19 = math.exp %18 : vector<8x128xf32>
    %cst_12 = arith.constant dense<0.000000e+00> : vector<8xf32>
    %20 = vector.multi_reduction <add>, %19, %cst_12 [1] : vector<8x128xf32> to vector<8xf32>
    %21 = vector.shape_cast %20 : vector<8xf32> to vector<8x1xf32>
    %22 = tpu.reciprocal %21 {approx = true} : vector<8x1xf32> -> vector<8x1xf32>
    %23 = vector.broadcast %22 : vector<8x1xf32> to vector<8x128xf32>
    %24 = arith.mulf %19, %23 : vector<8x128xf32>
    %c0_13 = arith.constant 0 : index
    %c0_14 = arith.constant 0 : index
    %25 = vector.load %arg6[%c0_13, %c0_14] : memref<8x128xf32, #tpu.memory_space<vmem>>, vector<8x128xf32>
    tpu.vector_store %arg6[%c0_13, %c0_14], %24 {strides = array<i32>} : memref<8x128xf32, #tpu.memory_space<vmem>>, vector<8x128xf32>,
    return
  }
  func.func @transform_0(%arg0: i32) -> (i32, i32) {
    %c0_i32 = arith.constant 0 : i32
    %c0_i32_0 = arith.constant 0 : i32
    return %arg0, %c0_i32 : i32, i32
  }
  func.func @transform_1(%arg0: i32) -> (i32, i32) {
    %c0_i32 = arith.constant 0 : i32
    %c0_i32_0 = arith.constant 0 : i32
    %c0_i32_1 = arith.constant 0 : i32
    return %c0_i32, %c0_i32_0 : i32, i32
  }
  func.func @transform_2(%arg0: i32) -> (i32, i32) {
    %c0_i32 = arith.constant 0 : i32
    %c0_i32_0 = arith.constant 0 : i32
    %c0_i32_1 = arith.constant 0 : i32
    return %c0_i32, %c0_i32_0 : i32, i32
  }
  func.func @transform_3(%arg0: i32) -> (i32, i32) {
    %c0_i32 = arith.constant 0 : i32
    %c0_i32_0 = arith.constant 0 : i32
    %c0_i32_1 = arith.constant 0 : i32
    return %c0_i32, %c0_i32_0 : i32, i32
  }
  func.func @transform_4(%arg0: i32) -> (i32, i32) {
    %c0_i32 = arith.constant 0 : i32
    %c0_i32_0 = arith.constant 0 : i32
    %c0_i32_1 = arith.constant 0 : i32
    return %c0_i32, %c0_i32_0 : i32, i32
  }
  func.func @transform_5(%arg0: i32) -> (i32, i32) {
    %c0_i32 = arith.constant 0 : i32
    %c0_i32_0 = arith.constant 0 : i32
    return %arg0, %c0_i32 : i32, i32
  }
}

</mosaic_0001>

<llo_original>
// kernel: _mlp_softmax_padded.1
$region0: #{_mlp_softmax_padded.1}
  #allocation0 [shape = 'u32[]', space=smem, size = 0x4, offset = 0x4, fixed_abs, tag = 'smem constant byte address 0x4 - core index']
  #allocation1 [shape = 'u32[144,128]{1,0:T(1,128)}', space=vmem, size = 0x12000, scoped, tag = 'internal scratch']
  %s0 = inlined_call_operand.hbm [shape: f32[8,32], index: 0, kind: input, shape index: {}]
  %s1 = inlined_call_operand.hbm [shape: bf16[32,128], index: 1, kind: input, shape index: {}]
  %s2 = inlined_call_operand.vmem [shape: f32[1,128], index: 2, kind: input, shape index: {}]
  %s3 = inlined_call_operand.hbm [shape: bf16[128,128], index: 3, kind: input, shape index: {}]
  %s4 = inlined_call_operand.vmem [shape: f32[1,128], index: 4, kind: input, shape index: {}]
  %s5 = inlined_call_operand.hbm [shape: f32[8,128], index: 5, kind: output, shape index: {}]
  %s6 = sld [smem:[#allocation0]]
  $region42: #{_mlp_softmax_padded.1} parent=0
    _
  %s8 = ssub.s32 1, %s6
  %s9 = scalar_select 0, %s8, %s6
  $region1: #{_mlp_softmax_padded.1} parent=0
    #allocation2 [shape = 'u8[4096]{0}', space=vmem, size = 0x1000, scoped, tag = 'input window, operand 0, single buffered']
    #allocation3 [shape = 's32[1]{0}', space=sflag, size = 0x4, scoped, tag = 'scoped memory for _mlp_softmax_padded.1']
    #allocation4 [shape = 's32[1]{0}', space=sflag, size = 0x4, scoped, tag = 'scoped memory for _mlp_softmax_padded.1']
    #allocation5 [shape = 'u8[8192]{0}', space=vmem, size = 0x2000, scoped, tag = 'input window, operand 1, single buffered']
    #allocation6 [shape = 's32[1]{0}', space=sflag, size = 0x4, scoped, tag = 'scoped memory for _mlp_softmax_padded.1']
    #allocation7 [shape = 'u8[32768]{0}', space=vmem, size = 0x8000, scoped, tag = 'input window, operand 3, single buffered']
    #allocation8 [shape = 'u8[4096]{0}', space=vmem, size = 0x1000, scoped, tag = 'output window, operand 0, single buffered']
    %10 = vsyncpa [#allocation3], 0
    %11 = vsyncpa [#allocation6], 0
    %12 = vsyncpa [#allocation4], 0
    // Predicated region
    $region2: #{_mlp_softmax_padded.1} parent=1 // pred_check
      _
    $region3: #{_mlp_softmax_padded.1} parent=1 // pred_check_branch
      %14 = sbr.rel (0) target = $region5
    $region4: #{_mlp_softmax_padded.1} parent=1 // pred_region
      %s16 = ssub.s32 128, 128
      %17 = vsyncadd [#allocation3], %s16
      %s19 = sshll.u32 [#allocation2], 4
      %s20 = int_to_ptr.vmem [resolvable:$true] %s19
      %22 = dma.hbm_to_vmem [thread:$0]  %s0, 128, %s20, [#allocation3]
    $region5: #{_mlp_softmax_padded.1} parent=1 // pred_fallthru
      _
    // Predicated region
    $region6: #{_mlp_softmax_padded.1} parent=1 // pred_check
      _
    $region7: #{_mlp_softmax_padded.1} parent=1 // pred_check_branch
      %24 = sbr.rel (0) target = $region9
    $region8: #{_mlp_softmax_padded.1} parent=1 // pred_region
      %s26 = ssub.s32 256, 256
      %27 = vsyncadd [#allocation6], %s26
      %s28 = sshll.u32 [#allocation5], 4
      %s29 = int_to_ptr.vmem [resolvable:$true] %s28
      %34 = dma.hbm_to_vmem [thread:$0]  %s1, 256, %s29, [#allocation6], 64, 64, 4
    $region9: #{_mlp_softmax_padded.1} parent=1 // pred_fallthru
      _
    // Predicated region
    $region10: #{_mlp_softmax_padded.1} parent=1 // pred_check
      _
    $region11: #{_mlp_softmax_padded.1} parent=1 // pred_check_branch
      %36 = sbr.rel (0) target = $region13
    $region12: #{_mlp_softmax_padded.1} parent=1 // pred_region
      _
    $region13: #{_mlp_softmax_padded.1} parent=1 // pred_fallthru
      _
    // Predicated region
    $region14: #{_mlp_softmax_padded.1} parent=1 // pred_check
      _
    $region15: #{_mlp_softmax_padded.1} parent=1 // pred_check_branch
      %38 = sbr.rel (0) target = $region17
    $region16: #{_mlp_softmax_padded.1} parent=1 // pred_region
      %s40 = ssub.s32 1024, 1024
      %41 = vsyncadd [#allocation6], %s40
      %s42 = sshll.u32 [#allocation7], 4
      %s43 = int_to_ptr.vmem [resolvable:$true] %s42
      %48 = dma.hbm_to_vmem [thread:$0]  %s3, 1024, %s43, [#allocation6], 64, 64, 4
    $region17: #{_mlp_softmax_padded.1} parent=1 // pred_fallthru
      _
    // Predicated region
    $region18: #{_mlp_softmax_padded.1} parent=1 // pred_check
      _
    $region19: #{_mlp_softmax_padded.1} parent=1 // pred_check_branch
      %50 = sbr.rel (0) target = $region21
    $region20: #{_mlp_softmax_padded.1} parent=1 // pred_region
      _
    $region21: #{_mlp_softmax_padded.1} parent=1 // pred_fallthru
      _
    // Predicated region
    $region22: #{_mlp_softmax_padded.1} parent=1 // pred_check
      _
    $region23: #{_mlp_softmax_padded.1} parent=1 // pred_check_branch
      %52 = sbr.rel (0) target = $region25
    $region24: #{_mlp_softmax_padded.1} parent=1 // pred_region
      %53 = dma.done [#allocation3], 128
    $region25: #{_mlp_softmax_padded.1} parent=1 // pred_fallthru
      _
    // Predicated region
    $region26: #{_mlp_softmax_padded.1} parent=1 // pred_check
      _
    $region27: #{_mlp_softmax_padded.1} parent=1 // pred_check_branch
      %55 = sbr.rel (0) target = $region29
    $region28: #{_mlp_softmax_padded.1} parent=1 // pred_region
      %56 = dma.done [#allocation6], 256
    $region29: #{_mlp_softmax_padded.1} parent=1 // pred_fallthru
      _
    // Predicated region
    $region30: #{_mlp_softmax_padded.1} parent=1 // pred_check
      _
    $region31: #{_mlp_softmax_padded.1} parent=1 // pred_check_branch
      %58 = sbr.rel (0) target = $region33
    $region32: #{_mlp_softmax_padded.1} parent=1 // pred_region
      %59 = dma.done [#allocation6], 1024
    $region33: #{_mlp_softmax_padded.1} parent=1 // pred_fallthru
      _
    %v61 = vld [vmem:[#allocation2] sm:$0xff]
    %v62 = vpack.c.bf16 %v61, %v61
    %v63 = vld [vmem:[#allocation5] sm:$0xf]
    %v64 = vld [vmem:[#allocation5 + $0x4] sm:$0xf]
    %v65 = vld [vmem:[#allocation5 + $0x8] sm:$0xf]
    %v66 = vld [vmem:[#allocation5 + $0xc] sm:$0xf]
    %v67 = vld [vmem:[%s2] sm:$0x1]
    %v69 = vlaneseq
    %v70 = vshrl.u32 %v69, 7
    %v71 = vsub.s32 0, %v70
    %v72 = vrot.slane %v67, %v71
    %v78 = vunpack.c.l.b16 %v63
    %v79 = vunpack.c.l.b16 %v64
    %v80 = vunpack.c.l.b16 %v65
    %v81 = vunpack.c.l.b16 %v66
    %v82 = vpack.c.b16 %v79, %v78
    %v83 = vpack.c.b16 %v81, %v80
    %vm86 = vcmask 261120
    %v88 = vsel %vm86, %v62, 0
    %90 = vmatprep.subr.bf16.mxu0 0
    %91 = vmatpush1.bf16.msra.mxu0 0
    %92 = vmatprep.subr.bf16.mxu0 0
    %93 = vmatpush1.bf16.msra.mxu0 0
    %94 = vmatprep.subr.bf16.mxu0 0
    %95 = vmatpush1.bf16.msra.mxu0 0
    %96 = vmatprep.subr.bf16.mxu0 0
    %97 = vmatpush1.bf16.msra.mxu0 0
    %98 = vmatprep.subr.bf16.mxu0 0
    %99 = vmatpush1.bf16.msra.mxu0 0
    %100 = vmatprep.subr.bf16.mxu0 0
    %101 = vmatpush1.bf16.msra.mxu0 0
    %102 = vmatprep.subr.bf16.mxu0 0
    %103 = vmatpush1.bf16.msra.mxu0 %v83
    %104 = vmatprep.subr.bf16.mxu0 0
    %105 = vmatpush1.bf16.msra.mxu0 %v82
    %106 = vmatprep.subr.bf16.mxu0 0
    %107 = vmatpush2.bf16.msra.mxu0 0
    %108 = vmatprep.subr.bf16.mxu0 0
    %109 = vmatpush2.bf16.msra.mxu0 0
    %110 = vmatprep.subr.bf16.mxu0 0
    %111 = vmatpush2.bf16.msra.mxu0 0
    %112 = vmatprep.subr.bf16.mxu0 0
    %113 = vmatpush2.bf16.msra.mxu0 0
    %114 = vmatprep.subr.bf16.mxu0 0
    %115 = vmatpush2.bf16.msra.mxu0 0
    %116 = vmatprep.subr.bf16.mxu0 0
    %117 = vmatpush2.bf16.msra.mxu0 0
    %118 = vmatprep.subr.bf16.mxu0 0
    %119 = vmatpush2.bf16.msra.mxu0 0
    %120 = vmatprep.subr.bf16.mxu0 0
    %121 = vmatpush2.bf16.msra.mxu0 0
    %122 = vmatprep.mubr.bf16.mxu0 0
    %123 = vmatmul.mubr.bf16.gmra.mxu0 %v88
    %v124 = vpop.f32.mrf.mxu0
    %v125 = vadd.f32 %v72, %v124
    %v126 = vpop.f32.mrf.mxu0
    %v127 = vpop.f32.mrf.mxu0
    %v128 = vpop.f32.mrf.mxu0
    %129 = vdwg.mxu0
    %v130 = vmax.f32 %v125, 0.0
    %v131 = vpack.c.bf16 %v130, %v130
    %v132 = vld [vmem:[#allocation7] sm:$0xf]
    %v133 = vld [vmem:[#allocation7 + $0x4] sm:$0xf]
    %v134 = vld [vmem:[#allocation7 + $0x8] sm:$0xf]
    %v135 = vld [vmem:[#allocation7 + $0xc] sm:$0xf]
    %v136 = vld [vmem:[#allocation7 + $0x10] sm:$0xf]
    %v137 = vld [vmem:[#allocation7 + $0x14] sm:$0xf]
    %v138 = vld [vmem:[#allocation7 + $0x18] sm:$0xf]
    %v139 = vld [vmem:[#allocation7 + $0x1c] sm:$0xf]
    %v140 = vld [vmem:[#allocation7 + $0x20] sm:$0xf]
    %v141 = vld [vmem:[#allocation7 + $0x24] sm:$0xf]
    %v142 = vld [vmem:[#allocation7 + $0x28] sm:$0xf]
    %v143 = vld [vmem:[#allocation7 + $0x2c] sm:$0xf]
    %v144 = vld [vmem:[#allocation7 + $0x30] sm:$0xf]
    %v145 = vld [vmem:[#allocation7 + $0x34] sm:$0xf]
    %v146 = vld [vmem:[#allocation7 + $0x38] sm:$0xf]
    %v147 = vld [vmem:[#allocation7 + $0x3c] sm:$0xf]
    %v148 = vld [vmem:[%s4] sm:$0x1]
    %v150 = vlaneseq
    %v151 = vshrl.u32 %v150, 7
    %v152 = vsub.s32 0, %v151
    %v153 = vrot.slane %v148, %v152
    %v171 = vunpack.c.l.b16 %v132
    %v172 = vunpack.c.l.b16 %v133
    %v173 = vunpack.c.l.b16 %v134
    %v174 = vunpack.c.l.b16 %v135
    %v175 = vunpack.c.l.b16 %v136
    %v176 = vunpack.c.l.b16 %v137
    %v177 = vunpack.c.l.b16 %v138
    %v178 = vunpack.c.l.b16 %v139
    %v179 = vunpack.c.l.b16 %v140
    %v180 = vunpack.c.l.b16 %v141
    %v181 = vunpack.c.l.b16 %v142
    %v182 = vunpack.c.l.b16 %v143
    %v183 = vunpack.c.l.b16 %v144
    %v184 = vunpack.c.l.b16 %v145
    %v185 = vunpack.c.l.b16 %v146
    %v186 = vunpack.c.l.b16 %v147
    %v187 = vpack.c.b16 %v172, %v171
    %v188 = vpack.c.b16 %v174, %v173
    %v189 = vpack.c.b16 %v176, %v175
    %v190 = vpack.c.b16 %v178, %v177
    %v191 = vpack.c.b16 %v180, %v179
    %v192 = vpack.c.b16 %v182, %v181
    %v193 = vpack.c.b16 %v184, %v183
    %v194 = vpack.c.b16 %v186, %v185
    %203 = vmatprep.subr.bf16.mxu0 0
    %204 = vmatpush1.bf16.msra.mxu0 %v194
    %205 = vmatprep.subr.bf16.mxu0 0
    %206 = vmatpush1.bf16.msra.mxu0 %v193
    %207 = vmatprep.subr.bf16.mxu0 0
    %208 = vmatpush1.bf16.msra.mxu0 %v192
    %209 = vmatprep.subr.bf16.mxu0 0
    %210 = vmatpush1.bf16.msra.mxu0 %v191
    %211 = vmatprep.subr.bf16.mxu0 0
    %212 = vmatpush1.bf16.msra.mxu0 %v190
    %213 = vmatprep.subr.bf16.mxu0 0
    %214 = vmatpush1.bf16.msra.mxu0 %v189
    %215 = vmatprep.subr.bf16.mxu0 0
    %216 = vmatpush1.bf16.msra.mxu0 %v188
    %217 = vmatprep.subr.bf16.mxu0 0
    %218 = vmatpush1.bf16.msra.mxu0 %v187
    %219 = vmatprep.subr.bf16.mxu0 0
    %220 = vmatpush2.bf16.msra.mxu0 0
    %221 = vmatprep.subr.bf16.mxu0 0
    %222 = vmatpush2.bf16.msra.mxu0 0
    %223 = vmatprep.subr.bf16.mxu0 0
    %224 = vmatpush2.bf16.msra.mxu0 0
    %225 = vmatprep.subr.bf16.mxu0 0
    %226 = vmatpush2.bf16.msra.mxu0 0
    %227 = vmatprep.subr.bf16.mxu0 0
    %228 = vmatpush2.bf16.msra.mxu0 0
    %229 = vmatprep.subr.bf16.mxu0 0
    %230 = vmatpush2.bf16.msra.mxu0 0
    %231 = vmatprep.subr.bf16.mxu0 0
    %232 = vmatpush2.bf16.msra.mxu0 0
    %233 = vmatprep.subr.bf16.mxu0 0
    %234 = vmatpush2.bf16.msra.mxu0 0
    %235 = vmatprep.mubr.bf16.mxu0 0
    %236 = vmatmul.mubr.bf16.gmra.mxu0 %v131
    %v237 = vpop.f32.mrf.mxu0
    %v238 = vadd.f32 %v153, %v237
    %v239 = vpop.f32.mrf.mxu0
    %v240 = vpop.f32.mrf.mxu0
    %v241 = vpop.f32.mrf.mxu0
    %242 = vdwg.mxu0
    %243 = vmax.xlane.f32.xlu0 %v238
    %v244 = vpop.xlane.xlu0 %243
    %v245 = vsub.f32 %v238, %v244
    %v246 = vmul.f32 %v245, 1.442695
    %v247 = vpow.pop %v246
    %248 = vadd.xlane.f32.xlu0 %v247
    %v249 = vpop.xlane.xlu0 %248
    %v250 = vrcp.pop %v249
    %v251 = vmul.f32 %v247, %v250
    %252 = vst [vmem:[#allocation8] sm:$0xff] %v251
    // Predicated region
    $region34: #{_mlp_softmax_padded.1} parent=1 // pred_check
      _
    $region35: #{_mlp_softmax_padded.1} parent=1 // pred_check_branch
      %254 = sbr.rel (0) target = $region37
    $region36: #{_mlp_softmax_padded.1} parent=1 // pred_region
      %s256 = ssub.s32 128, 128
      %257 = vsyncadd [#allocation4], %s256
      %s259 = sshll.u32 [#allocation8], 4
      %s260 = int_to_ptr.vmem [resolvable:$true] %s259
      %262 = dma.vmem_to_hbm [thread:$0]  %s260, 128, %s5, [#allocation4]
    $region37: #{_mlp_softmax_padded.1} parent=1 // pred_fallthru
      _
    // Predicated region
    $region38: #{_mlp_softmax_padded.1} parent=1 // pred_check
      _
    $region39: #{_mlp_softmax_padded.1} parent=1 // pred_check_branch
      %264 = sbr.rel (0) target = $region41
    $region40: #{_mlp_softmax_padded.1} parent=1 // pred_region
      %265 = dma.done [#allocation4], 128
    $region41: #{_mlp_softmax_padded.1} parent=1 // pred_fallthru
      _
    %266 = vsyncpa [#allocation3], 1
    %267 = vsyncpa [#allocation6], 1
    %268 = vsyncpa [#allocation4], 1

</llo_original>
